<compile_context>
chip_gen: v6e
topology: v6e:2x2x1
jax: 0.10.0
libtpu: 0.0.40
codegen_flags: <defaults>
</compile_context>

<pallas_src>
import jax
import jax.numpy as jnp
from jax.experimental import pallas as pl
from jax.experimental.pallas import tpu as pltpu

NET_W = 512


def _round_up(x, m):
    return (x + m - 1) // m * m


def _action_value_kernel(s_ref, a_ref, w1s_ref, w1a_ref, b1_ref,
                         w2_ref, b2_ref, w5_ref, b5_ref, o_ref):
    # In-kernel bf16 cast of the f32 activation tiles (VPU has huge slack);
    # avoids separate wrapper-side astype launches + HBM round-trips.
    s16 = s_ref[...].astype(jnp.bfloat16)
    a16 = a_ref[...].astype(jnp.bfloat16)

    # fc1 on the implicit concat(s, a): split matmul, f32 accumulation.
    h1 = jnp.dot(s16, w1s_ref[...], preferred_element_type=jnp.float32)
    h1 = h1 + jnp.dot(a16, w1a_ref[...], preferred_element_type=jnp.float32)
    h1 = jnp.maximum(h1 + b1_ref[...], 0.0)                        # f32 [tb, 512]

    # fc2 (+ Identity bn2) + relu; bf16 LHS for the native MXU path.
    h2 = jnp.dot(h1.astype(jnp.bfloat16), w2_ref[...],
                 preferred_element_type=jnp.float32)
    h2 = jnp.maximum(h2 + b2_ref[...], 0.0)                        # f32 [tb, 256]

    # fc5 emitted lane-dense: q laid out along lanes as a [1, tb] row
    # (w5_row @ h2^T on the MXU), + SMEM scalar bias.
    q = jnp.dot(w5_ref[...], h2.astype(jnp.bfloat16).T,
                preferred_element_type=jnp.float32)                # f32 [1, tb]
    o_ref[...] = q + b5_ref[0]


def action_value_forward(s, a, params, *, block_b=1024):
    """Pallas-backed forward of ActionValue. s: [B, obs], a: [B, act] -> [B, 1]."""
    w1s, w1a, b1, w2, b2, w5, b5 = params
    B, obs = s.shape
    act = a.shape[1]

    if B <= block_b:
        # Single grid step, full-array batch blocks (legal for any B, even
        # non-multiples of 8) -> no padding, no extra wrapper ops.
        tb, Bp = B, B
        s_in, a_in = s, a
    else:
        # Large-batch fallback: 8/128-aligned tiles; pad only if needed.
        tb = block_b
        Bp = _round_up(B, tb)
        s_in = jnp.pad(s, ((0, Bp - B), (0, 0))) if Bp != B else s
        a_in = jnp.pad(a, ((0, Bp - B), (0, 0))) if Bp != B else a

    steps = Bp // tb
    # Only shard across TensorCores (v7x megacore) when there is enough work
    # to amortize duplicating the resident-weight DMA on each core.
    semantics = ("parallel",) if steps >= 4 else ("arbitrary",)

    # Weights / biases: whole-array, VMEM-resident across all batch tiles.
    vspec = pl.BlockSpec(memory_space=pltpu.MemorySpace.VMEM)
    # b5 is a true scalar -> SMEM (no VMEM tile, no tiny input DMA).
    sspec = pl.BlockSpec(memory_space=pltpu.MemorySpace.SMEM)

    out = pl.pallas_call(
        _action_value_kernel,
        out_shape=jax.ShapeDtypeStruct((1, Bp), jnp.float32),
        grid=(steps,),
        in_specs=[
            pl.BlockSpec((tb, obs), lambda i: (i, 0)),   # s tile (f32)
            pl.BlockSpec((tb, act), lambda i: (i, 0)),   # a tile (f32)
            vspec,  # w1_s
            vspec,  # w1_a
            vspec,  # b1
            vspec,  # w2
            vspec,  # b2
            vspec,  # w5 (row)
            sspec,  # b5 scalar
        ],
        out_specs=pl.BlockSpec((1, tb), lambda i: (0, i)),
        compiler_params=pltpu.CompilerParams(dimension_semantics=semantics),
    )(s_in, a_in, w1s, w1a, b1, w2, b2, w5, b5)

    # (1, Bp) -> (Bp, 1) is a contiguous, metadata-only reshape.
    q = out.reshape(Bp, 1)
    return q[:B] if Bp != B else q


def init_params(obs_count, action_count, key):
    """Deterministic init matching PyTorch nn.Linear default
    (U[-1/sqrt(fan_in), +1/sqrt(fan_in)]).

    Matmul weights are stored transposed ([in, out]) and in bf16 (native MXU
    dtype); biases stay f32.  fc1's weight is split into the observation and
    action halves so the kernel never needs the concatenated input; fc5's
    weight is stored as a [1, 256] bf16 row (used as w5 @ h2^T)."""
    def linear(key, fan_in, fan_out):
        kw, kb = jax.random.split(key)
        bound = 1.0 / jnp.sqrt(jnp.float32(fan_in))
        w = jax.random.uniform(kw, (fan_in, fan_out), jnp.float32, -bound, bound)
        b = jax.random.uniform(kb, (1, fan_out), jnp.float32, -bound, bound)
        return w, b

    k1, k2, k5 = jax.random.split(key, 3)
    f_in = obs_count + action_count
    w1, b1 = linear(k1, f_in, NET_W)             # fc1: (obs+act) -> 512
    w2, b2 = linear(k2, NET_W, NET_W // 2)       # fc2: 512 -> 256
    w5, b5 = linear(k5, NET_W // 2, 1)           # fc5: 256 -> 1

    w1_s = w1[:obs_count].astype(jnp.bfloat16)   # [obs, 512]
    w1_a = w1[obs_count:].astype(jnp.bfloat16)   # [act, 512]
    w2_b = w2.astype(jnp.bfloat16)               # [512, 256]
    w5_row = w5.T.astype(jnp.bfloat16)           # [1, 256]
    b5_s = b5.reshape(1)                         # scalar, SMEM-resident
    # TODO(synk): fc3/fc4/bn1-bn4 exist in the PyTorch module but are unused in
    # forward (usebn=False -> Identity); not materialized here. The AdamW
    # optimizer is training-side and has no kernel equivalent.
    return (w1_s, w1_a, b1, w2_b, b2, w5_row, b5_s)


if __name__ == "__main__":
    # BipedalWalker-like sizes: 24-dim observation, 4-dim action, small batch.
    obs_count, action_count, batch = 24, 4, 64

    key = jax.random.PRNGKey(0)
    k_params, k_s, k_a = jax.random.split(key, 3)
    params = init_params(obs_count, action_count, k_params)

    s = jax.random.normal(k_s, (batch, obs_count), jnp.float32)
    a = jax.random.uniform(k_a, (batch, action_count), jnp.float32, -1.0, 1.0)

    q = action_value_forward(s, a, params)
    jax.block_until_ready(q)

    # Plain-JAX reference of the same (bf16-matmul, f32-accumulate) math.
    w1s, w1a, b1, w2, b2, w5, b5 = params
    s16, a16 = s.astype(jnp.bfloat16), a.astype(jnp.bfloat16)
    h1 = jnp.dot(s16, w1s, preferred_element_type=jnp.float32) \
        + jnp.dot(a16, w1a, preferred_element_type=jnp.float32)
    h1 = jnp.maximum(h1 + b1, 0.0)
    h2 = jnp.dot(h1.astype(jnp.bfloat16), w2, preferred_element_type=jnp.float32)
    h2 = jnp.maximum(h2 + b2, 0.0)
    ref = jnp.dot(h2.astype(jnp.bfloat16), w5.T,
                  preferred_element_type=jnp.float32) + b5

    assert q.shape == (batch, 1)
    assert jnp.allclose(q, ref, atol=1e-2, rtol=1e-2), float(jnp.max(jnp.abs(q - ref)))

    print("KERNEL_OK")
</pallas_src>

<mosaic_0001>
module attributes {stable_mosaic.version = 11 : i64} {
  func.func @_action_value_kernel(%arg0: i32, %arg1: memref<64x24xf32, #tpu.memory_space<vmem>>, %arg2: memref<64x4xf32, #tpu.memory_space<vmem>>, %arg3: memref<24x512xbf16, #tpu.memory_space<vmem>>, %arg4: memref<4x512xbf16, #tpu.memory_space<vmem>>, %arg5: memref<1x512xf32, #tpu.memory_space<vmem>>, %arg6: memref<512x256xbf16, #tpu.memory_space<vmem>>, %arg7: memref<1x256xf32, #tpu.memory_space<vmem>>, %arg8: memref<1x256xbf16, #tpu.memory_space<vmem>>, %arg9: memref<1xf32, #tpu.memory_space<smem>>, %arg10: memref<1x64xf32, #tpu.memory_space<vmem>>) attributes {dimension_semantics = [#tpu.dimension_semantics<arbitrary>], iteration_bounds = array<i64: 1>, scalar_prefetch = 0 : i64, scratch_operands = 0 : i64, tpu.core_type = #tpu.core_type<tc>, window_params = [{transform_indices = @transform_0, window_bounds = array<i64: 64, 24>}, {transform_indices = @transform_1, window_bounds = array<i64: 64, 4>}, {pipeline_mode = #tpu.pipeline_mode<synchronous>, transform_indices = @transform_2, window_bounds = array<i64: 24, 512>}, {pipeline_mode = #tpu.pipeline_mode<synchronous>, transform_indices = @transform_3, window_bounds = array<i64: 4, 512>}, {pipeline_mode = #tpu.pipeline_mode<synchronous>, transform_indices = @transform_4, window_bounds = array<i64: 1, 512>}, {pipeline_mode = #tpu.pipeline_mode<synchronous>, transform_indices = @transform_5, window_bounds = array<i64: 512, 256>}, {pipeline_mode = #tpu.pipeline_mode<synchronous>, transform_indices = @transform_6, window_bounds = array<i64: 1, 256>}, {pipeline_mode = #tpu.pipeline_mode<synchronous>, transform_indices = @transform_7, window_bounds = array<i64: 1, 256>}, {transform_indices = @transform_8, window_bounds = array<i64: 1>}, {transform_indices = @transform_9, window_bounds = array<i64: 1, 64>}]} {
    %c0 = arith.constant 0 : index
    %c0_0 = arith.constant 0 : index
    %0 = vector.load %arg1[%c0, %c0_0] : memref<64x24xf32, #tpu.memory_space<vmem>>, vector<64x24xf32>
    %1 = arith.truncf %0 : vector<64x24xf32> to vector<64x24xbf16>
    %c0_1 = arith.constant 0 : index
    %c0_2 = arith.constant 0 : index
    %2 = vector.load %arg2[%c0_1, %c0_2] : memref<64x4xf32, #tpu.memory_space<vmem>>, vector<64x4xf32>
    %3 = arith.truncf %2 : vector<64x4xf32> to vector<64x4xbf16>
    %c0_3 = arith.constant 0 : index
    %c0_4 = arith.constant 0 : index
    %4 = vector.load %arg3[%c0_3, %c0_4] : memref<24x512xbf16, #tpu.memory_space<vmem>>, vector<24x512xbf16>
    %cst = arith.constant dense<0.000000e+00> : vector<64x512xf32>
    %5 = tpu.matmul %1, %4, %cst {dimension_numbers = #tpu.dot_dimension_numbers<[1], [0], [0], [1], [0, 0, 1, 1], [], []>} : vector<64x24xbf16>, vector<24x512xbf16>, vector<64x512xf32> -> vector<64x512xf32>
    %c0_5 = arith.constant 0 : index
    %c0_6 = arith.constant 0 : index
    %6 = vector.load %arg4[%c0_5, %c0_6] : memref<4x512xbf16, #tpu.memory_space<vmem>>, vector<4x512xbf16>
    %cst_7 = arith.constant dense<0.000000e+00> : vector<64x512xf32>
    %7 = tpu.matmul %3, %6, %cst_7 {dimension_numbers = #tpu.dot_dimension_numbers<[1], [0], [0], [1], [0, 0, 1, 1], [], []>} : vector<64x4xbf16>, vector<4x512xbf16>, vector<64x512xf32> -> vector<64x512xf32>
    %8 = arith.addf %5, %7 : vector<64x512xf32>
    %c0_8 = arith.constant 0 : index
    %c0_9 = arith.constant 0 : index
    %9 = vector.load %arg5[%c0_8, %c0_9] : memref<1x512xf32, #tpu.memory_space<vmem>>, vector<1x512xf32>
    %10 = vector.broadcast %9 : vector<1x512xf32> to vector<64x512xf32>
    %11 = arith.addf %8, %10 : vector<64x512xf32>
    %cst_10 = arith.constant 0.000000e+00 : f32
    %12 = vector.broadcast %cst_10 : f32 to vector<64x512xf32>
    %13 = arith.maximumf %11, %12 : vector<64x512xf32>
    %14 = arith.truncf %13 : vector<64x512xf32> to vector<64x512xbf16>
    %c0_11 = arith.constant 0 : index
    %c0_12 = arith.constant 0 : index
    %15 = vector.load %arg6[%c0_11, %c0_12] : memref<512x256xbf16, #tpu.memory_space<vmem>>, vector<512x256xbf16>
    %cst_13 = arith.constant dense<0.000000e+00> : vector<64x256xf32>
    %16 = tpu.matmul %14, %15, %cst_13 {dimension_numbers = #tpu.dot_dimension_numbers<[1], [0], [0], [1], [0, 0, 1, 1], [], []>} : vector<64x512xbf16>, vector<512x256xbf16>, vector<64x256xf32> -> vector<64x256xf32>
    %c0_14 = arith.constant 0 : index
    %c0_15 = arith.constant 0 : index
    %17 = vector.load %arg7[%c0_14, %c0_15] : memref<1x256xf32, #tpu.memory_space<vmem>>, vector<1x256xf32>
    %18 = vector.broadcast %17 : vector<1x256xf32> to vector<64x256xf32>
    %19 = arith.addf %16, %18 : vector<64x256xf32>
    %cst_16 = arith.constant 0.000000e+00 : f32
    %20 = vector.broadcast %cst_16 : f32 to vector<64x256xf32>
    %21 = arith.maximumf %19, %20 : vector<64x256xf32>
    %c0_17 = arith.constant 0 : index
    %c0_18 = arith.constant 0 : index
    %22 = vector.load %arg8[%c0_17, %c0_18] : memref<1x256xbf16, #tpu.memory_space<vmem>>, vector<1x256xbf16>
    %23 = arith.truncf %21 : vector<64x256xf32> to vector<64x256xbf16>
    %24 = tpu.transpose %23, [1, 0] : vector<64x256xbf16> -> vector<256x64xbf16>
    %cst_19 = arith.constant dense<0.000000e+00> : vector<1x64xf32>
    %25 = tpu.matmul %22, %24, %cst_19 {dimension_numbers = #tpu.dot_dimension_numbers<[1], [0], [0], [1], [0, 0, 1, 1], [], []>} : vector<1x256xbf16>, vector<256x64xbf16>, vector<1x64xf32> -> vector<1x64xf32>
    %c0_20 = arith.constant 0 : index
    %26 = memref.load %arg9[%c0_20] : memref<1xf32, #tpu.memory_space<smem>>
    %27 = vector.broadcast %26 : f32 to vector<1x64xf32>
    %28 = arith.addf %25, %27 : vector<1x64xf32>
    %c0_21 = arith.constant 0 : index
    %c0_22 = arith.constant 0 : index
    %29 = vector.load %arg10[%c0_21, %c0_22] : memref<1x64xf32, #tpu.memory_space<vmem>>, vector<1x64xf32>
    tpu.vector_store %arg10[%c0_21, %c0_22], %28 {strides = array<i32>} : memref<1x64xf32, #tpu.memory_space<vmem>>, vector<1x64xf32>,
    return
  }
  func.func @transform_0(%arg0: i32) -> (i32, i32) {
    %c0_i32 = arith.constant 0 : i32
    %c0_i32_0 = arith.constant 0 : i32
    return %arg0, %c0_i32 : i32, i32
  }
  func.func @transform_1(%arg0: i32) -> (i32, i32) {
    %c0_i32 = arith.constant 0 : i32
    %c0_i32_0 = arith.constant 0 : i32
    return %arg0, %c0_i32 : i32, i32
  }
  func.func @transform_2(%arg0: i32) -> (i32, i32) {
    %c0_i32 = arith.constant 0 : i32
    %c0_i32_0 = arith.constant 0 : i32
    %c0_i32_1 = arith.constant 0 : i32
    return %c0_i32, %c0_i32_0 : i32, i32
  }
  func.func @transform_3(%arg0: i32) -> (i32, i32) {
    %c0_i32 = arith.constant 0 : i32
    %c0_i32_0 = arith.constant 0 : i32
    %c0_i32_1 = arith.constant 0 : i32
    return %c0_i32, %c0_i32_0 : i32, i32
  }
  func.func @transform_4(%arg0: i32) -> (i32, i32) {
    %c0_i32 = arith.constant 0 : i32
    %c0_i32_0 = arith.constant 0 : i32
    %c0_i32_1 = arith.constant 0 : i32
    return %c0_i32, %c0_i32_0 : i32, i32
  }
  func.func @transform_5(%arg0: i32) -> (i32, i32) {
    %c0_i32 = arith.constant 0 : i32
    %c0_i32_0 = arith.constant 0 : i32
    %c0_i32_1 = arith.constant 0 : i32
    return %c0_i32, %c0_i32_0 : i32, i32
  }
  func.func @transform_6(%arg0: i32) -> (i32, i32) {
    %c0_i32 = arith.constant 0 : i32
    %c0_i32_0 = arith.constant 0 : i32
    %c0_i32_1 = arith.constant 0 : i32
    return %c0_i32, %c0_i32_0 : i32, i32
  }
  func.func @transform_7(%arg0: i32) -> (i32, i32) {
    %c0_i32 = arith.constant 0 : i32
    %c0_i32_0 = arith.constant 0 : i32
    %c0_i32_1 = arith.constant 0 : i32
    return %c0_i32, %c0_i32_0 : i32, i32
  }
  func.func @transform_8(%arg0: i32) -> i32 {
    %c0_i32 = arith.constant 0 : i32
    %c0_i32_0 = arith.constant 0 : i32
    return %c0_i32 : i32
  }
  func.func @transform_9(%arg0: i32) -> (i32, i32) {
    %c0_i32 = arith.constant 0 : i32
    %c0_i32_0 = arith.constant 0 : i32
    return %c0_i32, %arg0 : i32, i32
  }
}

</mosaic_0001>

<llo_original>
// kernel: tpu_custom_call.1
$region0: #{tpu_custom_call.1}
  #allocation0 [shape = 'u32[]', space=smem, size = 0x4, offset = 0x4, fixed_abs, tag = 'smem constant byte address 0x4 - core index']
  #allocation1 [shape = 'u32[144,128]{1,0:T(1,128)}', space=vmem, size = 0x12000, scoped, tag = 'internal scratch']
  #allocation2 [shape = 'f32[1]{0:T(128)S(6)}', space=smem, size = 0x200, scoped, tag = 'scoped memory for tpu_custom_call.1']
  %s0 = inlined_call_operand.vmem [shape: f32[64,24], index: 0, kind: input, shape index: {}]
  %s1 = inlined_call_operand.vmem [shape: f32[64,4], index: 1, kind: input, shape index: {}]
  %s2 = inlined_call_operand.vmem [shape: bf16[24,512], index: 2, kind: input, shape index: {}]
  %s3 = inlined_call_operand.vmem [shape: bf16[4,512], index: 3, kind: input, shape index: {}]
  %s4 = inlined_call_operand.vmem [shape: f32[1,512], index: 4, kind: input, shape index: {}]
  %s5 = inlined_call_operand.hbm [shape: bf16[512,256], index: 5, kind: input, shape index: {}]
  %s6 = inlined_call_operand.vmem [shape: f32[1,256], index: 6, kind: input, shape index: {}]
  %s7 = inlined_call_operand.vmem [shape: bf16[1,256], index: 7, kind: input, shape index: {}]
  %s8 = inlined_call_operand.<no memory space> [shape: f32[1], index: 8, kind: input, shape index: {}]
  %s9 = inlined_call_operand.hbm [shape: f32[1,64], index: 9, kind: output, shape index: {}]
  %s10 = sld [smem:[#allocation0]]
  $region50: #{tpu_custom_call.1} parent=0
    _
  %s12 = ssub.s32 1, %s10
  %s13 = scalar_select 0, %s12, %s10
  %14 = sst [smem:[#allocation2]] %s8
  $region1: #{tpu_custom_call.1} parent=0
    #allocation3 [shape = 'u8[262144]{0}', space=vmem, size = 0x40000, scoped, tag = 'input window, operand 5, single buffered']
    #allocation4 [shape = 's32[1]{0}', space=sflag, size = 0x4, scoped, tag = 'scoped memory for tpu_custom_call.1']
    #allocation5 [shape = 's32[1]{0}', space=sflag, size = 0x4, scoped, tag = 'scoped memory for tpu_custom_call.1']
    #allocation6 [shape = 'u8[512]{0}', space=vmem, size = 0x400, scoped, tag = 'output window, operand 0, single buffered']
    %15 = vsyncpa [#allocation4], 0
    %16 = vsyncpa [#allocation5], 0
    // Predicated region
    $region2: #{tpu_custom_call.1} parent=1 // pred_check
      _
    $region3: #{tpu_custom_call.1} parent=1 // pred_check_branch
      %18 = sbr.rel (0) target = $region5
    $region4: #{tpu_custom_call.1} parent=1 // pred_region
      _
    $region5: #{tpu_custom_call.1} parent=1 // pred_fallthru
      _
    // Predicated region
    $region6: #{tpu_custom_call.1} parent=1 // pred_check
      _
    $region7: #{tpu_custom_call.1} parent=1 // pred_check_branch
      %20 = sbr.rel (0) target = $region9
    $region8: #{tpu_custom_call.1} parent=1 // pred_region
      _
    $region9: #{tpu_custom_call.1} parent=1 // pred_fallthru
      _
    // Predicated region
    $region10: #{tpu_custom_call.1} parent=1 // pred_check
      _
    $region11: #{tpu_custom_call.1} parent=1 // pred_check_branch
      %22 = sbr.rel (0) target = $region13
    $region12: #{tpu_custom_call.1} parent=1 // pred_region
      _
    $region13: #{tpu_custom_call.1} parent=1 // pred_fallthru
      _
    // Predicated region
    $region14: #{tpu_custom_call.1} parent=1 // pred_check
      _
    $region15: #{tpu_custom_call.1} parent=1 // pred_check_branch
      %24 = sbr.rel (0) target = $region17
    $region16: #{tpu_custom_call.1} parent=1 // pred_region
      _
    $region17: #{tpu_custom_call.1} parent=1 // pred_fallthru
      _
    // Predicated region
    $region18: #{tpu_custom_call.1} parent=1 // pred_check
      _
    $region19: #{tpu_custom_call.1} parent=1 // pred_check_branch
      %26 = sbr.rel (0) target = $region21
    $region20: #{tpu_custom_call.1} parent=1 // pred_region
      _
    $region21: #{tpu_custom_call.1} parent=1 // pred_fallthru
      _
    // Predicated region
    $region22: #{tpu_custom_call.1} parent=1 // pred_check
      _
    $region23: #{tpu_custom_call.1} parent=1 // pred_check_branch
      %28 = sbr.rel (0) target = $region25
    $region24: #{tpu_custom_call.1} parent=1 // pred_region
      %s30 = ssub.s32 8192, 8192
      %31 = vsyncadd [#allocation4], %s30
      %s32 = sshll.u32 [#allocation3], 4
      %s33 = int_to_ptr.vmem [resolvable:$true] %s32
      %38 = dma.hbm_to_vmem [thread:$0]  %s5, 8192, %s33, [#allocation4], 128, 128, 8
    $region25: #{tpu_custom_call.1} parent=1 // pred_fallthru
      _
    // Predicated region
    $region26: #{tpu_custom_call.1} parent=1 // pred_check
      _
    $region27: #{tpu_custom_call.1} parent=1 // pred_check_branch
      %40 = sbr.rel (0) target = $region29
    $region28: #{tpu_custom_call.1} parent=1 // pred_region
      _
    $region29: #{tpu_custom_call.1} parent=1 // pred_fallthru
      _
    // Predicated region
    $region30: #{tpu_custom_call.1} parent=1 // pred_check
      _
    $region31: #{tpu_custom_call.1} parent=1 // pred_check_branch
      %42 = sbr.rel (0) target = $region33
    $region32: #{tpu_custom_call.1} parent=1 // pred_region
      _
    $region33: #{tpu_custom_call.1} parent=1 // pred_fallthru
      _
    // Predicated region
    $region34: #{tpu_custom_call.1} parent=1 // pred_check
      _
    $region35: #{tpu_custom_call.1} parent=1 // pred_check_branch
      %44 = sbr.rel (0) target = $region37
    $region36: #{tpu_custom_call.1} parent=1 // pred_region
      _
    $region37: #{tpu_custom_call.1} parent=1 // pred_fallthru
      _
    // Predicated region
    $region38: #{tpu_custom_call.1} parent=1 // pred_check
      _
    $region39: #{tpu_custom_call.1} parent=1 // pred_check_branch
      %46 = sbr.rel (0) target = $region41
    $region40: #{tpu_custom_call.1} parent=1 // pred_region
      %47 = dma.done [#allocation4], 8192
    $region41: #{tpu_custom_call.1} parent=1 // pred_fallthru
      _
    %v49 = vld [vmem:[%s0] sm:$0xff]
    %v50 = vld [vmem:[%s0 + $0x8] sm:$0xff]
    %v51 = vld [vmem:[%s0 + $0x10] sm:$0xff]
    %v52 = vld [vmem:[%s0 + $0x18] sm:$0xff]
    %v53 = vld [vmem:[%s0 + $0x20] sm:$0xff]
    %v54 = vld [vmem:[%s0 + $0x28] sm:$0xff]
    %v55 = vld [vmem:[%s0 + $0x30] sm:$0xff]
    %v56 = vld [vmem:[%s0 + $0x38] sm:$0xff]
    %v57 = vpack.c.bf16 %v50, %v49
    %v58 = vpack.c.bf16 %v52, %v51
    %v59 = vpack.c.bf16 %v54, %v53
    %v60 = vpack.c.bf16 %v56, %v55
    %v61 = vld [vmem:[%s1] sm:$0xff]
    %v62 = vld [vmem:[%s1 + $0x8] sm:$0xff]
    %v63 = vld [vmem:[%s1 + $0x10] sm:$0xff]
    %v64 = vld [vmem:[%s1 + $0x18] sm:$0xff]
    %v65 = vld [vmem:[%s1 + $0x20] sm:$0xff]
    %v66 = vld [vmem:[%s1 + $0x28] sm:$0xff]
    %v67 = vld [vmem:[%s1 + $0x30] sm:$0xff]
    %v68 = vld [vmem:[%s1 + $0x38] sm:$0xff]
    %v69 = vpack.c.bf16 %v62, %v61
    %v70 = vpack.c.bf16 %v64, %v63
    %v71 = vpack.c.bf16 %v66, %v65
    %v72 = vpack.c.bf16 %v68, %v67
    %v73 = vld [vmem:[%s2] sm:$0xff]
    %v74 = vld [vmem:[%s2 + $0x8] sm:$0xff]
    %v75 = vld [vmem:[%s2 + $0x10] sm:$0xff]
    %v76 = vld [vmem:[%s2 + $0x18] sm:$0xff]
    %v77 = vld [vmem:[%s2 + $0x20] sm:$0xff]
    %v78 = vld [vmem:[%s2 + $0x28] sm:$0xff]
    %v79 = vld [vmem:[%s3] sm:$0xff]
    %v81 = vcombine.high %v79, %v79
    %v83 = vunpack.c.l.s4 1983009808
    %v84 = vunpack.c.0.s8 %v83
    %v85 = vlaneseq
    %v86 = vshrl.u32 %v85, 7
    %v87 = vsub.s32 %v84, %v86
    %v88 = vrot.slane %v79, %v87
    %v90 = vunpack.c.l.s4 1983009808
    %v91 = vunpack.c.0.s8 %v90
    %v92 = vlaneseq
    %v93 = vshrl.u32 %v92, 7
    %v94 = vsub.s32 %v91, %v93
    %v95 = vrot.slane %v81, %v94
    %v96 = vcombine.high %v88, %v88
    %v97 = vcombine.high %v95, %v95
    %vm98 = vcmask 31744
    %v100 = vsel %vm98, %v69, 0
    %v103 = vsel %vm98, %v70, 0
    %v106 = vsel %vm98, %v71, 0
    %v109 = vsel %vm98, %v72, 0
    %vm111 = vcmask 1041408
    %v113 = vsel %vm111, %v88, 0
    %v116 = vsel %vm111, %v96, 0
    %v119 = vsel %vm111, %v95, 0
    %v122 = vsel %vm111, %v97, 0
    %124 = vmatprep.subr.bf16.mxu0 0
    %125 = vmatpush1.bf16.msra.mxu0 0
    %126 = vmatprep.subr.bf16.mxu0 0
    %127 = vmatpush1.bf16.msra.mxu0 0
    %128 = vmatprep.subr.bf16.mxu0 0
    %129 = vmatpush1.bf16.msra.mxu0 0
    %130 = vmatprep.subr.bf16.mxu0 0
    %131 = vmatpush1.bf16.msra.mxu0 0
    %132 = vmatprep.subr.bf16.mxu0 0
    %133 = vmatpush1.bf16.msra.mxu0 0
    %134 = vmatprep.subr.bf16.mxu0 0
    %135 = vmatpush1.bf16.msra.mxu0 0
    %136 = vmatprep.subr.bf16.mxu0 0
    %137 = vmatpush1.bf16.msra.mxu0 0
    %138 = vmatprep.subr.bf16.mxu0 %v116
    %139 = vmatpush1.bf16.msra.mxu0 %v113
    %140 = vmatprep.subr.bf16.mxu0 0
    %141 = vmatpush2.bf16.msra.mxu0 0
    %142 = vmatprep.subr.bf16.mxu0 0
    %143 = vmatpush2.bf16.msra.mxu0 0
    %144 = vmatprep.subr.bf16.mxu0 0
    %145 = vmatpush2.bf16.msra.mxu0 0
    %146 = vmatprep.subr.bf16.mxu0 0
    %147 = vmatpush2.bf16.msra.mxu0 0
    %148 = vmatprep.subr.bf16.mxu0 0
    %149 = vmatpush2.bf16.msra.mxu0 0
    %150 = vmatprep.subr.bf16.mxu0 0
    %151 = vmatpush2.bf16.msra.mxu0 0
    %152 = vmatprep.subr.bf16.mxu0 0
    %153 = vmatpush2.bf16.msra.mxu0 0
    %154 = vmatprep.subr.bf16.mxu0 0
    %155 = vmatpush2.bf16.msra.mxu0 0
    %156 = vmatprep.mubr.bf16.mxu0 0
    %157 = vmatmul.mubr.bf16.gmra.mxu0 %v100
    %v158 = vpop.f32.mrf.mxu0
    %v159 = vadd.f32 0.0, %v158
    %v160 = vpop.f32.mrf.mxu0
    %v161 = vadd.f32 0.0, %v160
    %v162 = vpop.f32.mrf.mxu0
    %v163 = vadd.f32 0.0, %v162
    %v164 = vpop.f32.mrf.mxu0
    %v165 = vadd.f32 0.0, %v164
    %166 = vmatprep.mubr.bf16.mxu0 0
    %167 = vmatmul.mubr.bf16.gmra.mxu0 %v103
    %v168 = vpop.f32.mrf.mxu0
    %v169 = vadd.f32 0.0, %v168
    %v170 = vpop.f32.mrf.mxu0
    %v171 = vadd.f32 0.0, %v170
    %v172 = vpop.f32.mrf.mxu0
    %v173 = vadd.f32 0.0, %v172
    %v174 = vpop.f32.mrf.mxu0
    %v175 = vadd.f32 0.0, %v174
    %176 = vmatprep.mubr.bf16.mxu0 0
    %177 = vmatmul.mubr.bf16.gmra.mxu0 %v106
    %v178 = vpop.f32.mrf.mxu0
    %v179 = vadd.f32 0.0, %v178
    %v180 = vpop.f32.mrf.mxu0
    %v181 = vadd.f32 0.0, %v180
    %v182 = vpop.f32.mrf.mxu0
    %v183 = vadd.f32 0.0, %v182
    %v184 = vpop.f32.mrf.mxu0
    %v185 = vadd.f32 0.0, %v184
    %186 = vmatprep.mubr.bf16.mxu0 0
    %187 = vmatmul.mubr.bf16.gmra.mxu0 %v109
    %v188 = vpop.f32.mrf.mxu0
    %v189 = vadd.f32 0.0, %v188
    %v190 = vpop.f32.mrf.mxu0
    %v191 = vadd.f32 0.0, %v190
    %v192 = vpop.f32.mrf.mxu0
    %v193 = vadd.f32 0.0, %v192
    %v194 = vpop.f32.mrf.mxu0
    %v195 = vadd.f32 0.0, %v194
    %196 = vdwg.mxu0
    %197 = vmatprep.subr.bf16.mxu0 0
    %198 = vmatpush1.bf16.msra.mxu0 0
    %199 = vmatprep.subr.bf16.mxu0 0
    %200 = vmatpush1.bf16.msra.mxu0 0
    %201 = vmatprep.subr.bf16.mxu0 0
    %202 = vmatpush1.bf16.msra.mxu0 0
    %203 = vmatprep.subr.bf16.mxu0 0
    %204 = vmatpush1.bf16.msra.mxu0 0
    %205 = vmatprep.subr.bf16.mxu0 0
    %206 = vmatpush1.bf16.msra.mxu0 0
    %207 = vmatprep.subr.bf16.mxu0 0
    %208 = vmatpush1.bf16.msra.mxu0 0
    %209 = vmatprep.subr.bf16.mxu0 0
    %210 = vmatpush1.bf16.msra.mxu0 0
    %211 = vmatprep.subr.bf16.mxu0 %v122
    %212 = vmatpush1.bf16.msra.mxu0 %v119
    %213 = vmatprep.subr.bf16.mxu0 0
    %214 = vmatpush2.bf16.msra.mxu0 0
    %215 = vmatprep.subr.bf16.mxu0 0
    %216 = vmatpush2.bf16.msra.mxu0 0
    %217 = vmatprep.subr.bf16.mxu0 0
    %218 = vmatpush2.bf16.msra.mxu0 0
    %219 = vmatprep.subr.bf16.mxu0 0
    %220 = vmatpush2.bf16.msra.mxu0 0
    %221 = vmatprep.subr.bf16.mxu0 0
    %222 = vmatpush2.bf16.msra.mxu0 0
    %223 = vmatprep.subr.bf16.mxu0 0
    %224 = vmatpush2.bf16.msra.mxu0 0
    %225 = vmatprep.subr.bf16.mxu0 0
    %226 = vmatpush2.bf16.msra.mxu0 0
    %227 = vmatprep.subr.bf16.mxu0 0
    %228 = vmatpush2.bf16.msra.mxu0 0
    %229 = vmatprep.mubr.bf16.mxu0 0
    %230 = vmatmul.mubr.bf16.gmra.mxu0 %v100
    %v231 = vpop.f32.mrf.mxu0
    %v232 = vadd.f32 0.0, %v231
    %v233 = vpop.f32.mrf.mxu0
    %v234 = vadd.f32 0.0, %v233
    %v235 = vpop.f32.mrf.mxu0
    %v236 = vadd.f32 0.0, %v235
    %v237 = vpop.f32.mrf.mxu0
    %v238 = vadd.f32 0.0, %v237
    %239 = vmatprep.mubr.bf16.mxu0 0
    %240 = vmatmul.mubr.bf16.gmra.mxu0 %v103
    %v241 = vpop.f32.mrf.mxu0
    %v242 = vadd.f32 0.0, %v241
    %v243 = vpop.f32.mrf.mxu0
    %v244 = vadd.f32 0.0, %v243
    %v245 = vpop.f32.mrf.mxu0
    %v246 = vadd.f32 0.0, %v245
    %v247 = vpop.f32.mrf.mxu0
    %v248 = vadd.f32 0.0, %v247
    %249 = vmatprep.mubr.bf16.mxu0 0
    %250 = vmatmul.mubr.bf16.gmra.mxu0 %v106
    %v251 = vpop.f32.mrf.mxu0
    %v252 = vadd.f32 0.0, %v251
    %v253 = vpop.f32.mrf.mxu0
    %v254 = vadd.f32 0.0, %v253
    %v255 = vpop.f32.mrf.mxu0
    %v256 = vadd.f32 0.0, %v255
    %v257 = vpop.f32.mrf.mxu0
    %v258 = vadd.f32 0.0, %v257
    %259 = vmatprep.mubr.bf16.mxu0 0
    %260 = vmatmul.mubr.bf16.gmra.mxu0 %v109
    %v261 = vpop.f32.mrf.mxu0
    %v262 = vadd.f32 0.0, %v261
    %v263 = vpop.f32.mrf.mxu0
    %v264 = vadd.f32 0.0, %v263
    %v265 = vpop.f32.mrf.mxu0
    %v266 = vadd.f32 0.0, %v265
    %v267 = vpop.f32.mrf.mxu0
    %v268 = vadd.f32 0.0, %v267
    %269 = vdwg.mxu0
    %v276 = vunpack.c.l.b16 %v73
    %v277 = vunpack.c.h.b16 %v73
    %v278 = vunpack.c.l.b16 %v74
    %v279 = vunpack.c.h.b16 %v74
    %v280 = vunpack.c.l.b16 %v75
    %v281 = vunpack.c.h.b16 %v75
    %v282 = vunpack.c.l.b16 %v76
    %v283 = vunpack.c.h.b16 %v76
    %v284 = vunpack.c.l.b16 %v77
    %v285 = vunpack.c.h.b16 %v77
    %v286 = vunpack.c.l.b16 %v78
    %v287 = vunpack.c.h.b16 %v78
    %v288 = vpack.c.b16 %v280, %v276
    %v289 = vpack.c.b16 %v281, %v277
    %v290 = vpack.c.b16 %v282, %v278
    %v291 = vpack.c.b16 %v283, %v279
    %v292 = vpack.c.b16 %v284, %v284
    %v293 = vpack.c.b16 %v285, %v285
    %v294 = vpack.c.b16 %v286, %v286
    %v295 = vpack.c.b16 %v287, %v287
    %vm300 = vcmask 195584
    %v302 = vsel %vm300, %v57, 0
    %v305 = vsel %vm300, %v58, 0
    %v308 = vsel %vm300, %v59, 0
    %v311 = vsel %vm300, %v60, 0
    %vm313 = vcmask 1043456
    %v315 = vsel %vm313, %v292, 0
    %v318 = vsel %vm313, %v293, 0
    %v321 = vsel %vm313, %v294, 0
    %v324 = vsel %vm313, %v295, 0
    %326 = vmatprep.subr.bf16.mxu0 0
    %327 = vmatpush1.bf16.msra.mxu0 0
    %328 = vmatprep.subr.bf16.mxu0 0
    %329 = vmatpush1.bf16.msra.mxu0 0
    %330 = vmatprep.subr.bf16.mxu0 0
    %331 = vmatpush1.bf16.msra.mxu0 0
    %332 = vmatprep.subr.bf16.mxu0 0
    %333 = vmatpush1.bf16.msra.mxu0 0
    %334 = vmatprep.subr.bf16.mxu0 0
    %335 = vmatpush1.bf16.msra.mxu0 0
    %336 = vmatprep.subr.bf16.mxu0 0
    %337 = vmatpush1.bf16.msra.mxu0 0
    %338 = vmatprep.subr.bf16.mxu0 %v318
    %339 = vmatpush1.bf16.msra.mxu0 %v315
    %340 = vmatprep.subr.bf16.mxu0 %v289
    %341 = vmatpush1.bf16.msra.mxu0 %v288
    %342 = vmatprep.subr.bf16.mxu0 0
    %343 = vmatpush2.bf16.msra.mxu0 0
    %344 = vmatprep.subr.bf16.mxu0 0
    %345 = vmatpush2.bf16.msra.mxu0 0
    %346 = vmatprep.subr.bf16.mxu0 0
    %347 = vmatpush2.bf16.msra.mxu0 0
    %348 = vmatprep.subr.bf16.mxu0 0
    %349 = vmatpush2.bf16.msra.mxu0 0
    %350 = vmatprep.subr.bf16.mxu0 0
    %351 = vmatpush2.bf16.msra.mxu0 0
    %352 = vmatprep.subr.bf16.mxu0 0
    %353 = vmatpush2.bf16.msra.mxu0 0
    %354 = vmatprep.subr.bf16.mxu0 0
    %355 = vmatpush2.bf16.msra.mxu0 0
    %356 = vmatprep.subr.bf16.mxu0 0
    %357 = vmatpush2.bf16.msra.mxu0 0
    %358 = vmatprep.mubr.bf16.mxu0 0
    %359 = vmatmul.mubr.bf16.gmra.mxu0 %v302
    %v360 = vpop.f32.mrf.mxu0
    %v361 = vadd.f32 %v159, %v360
    %v362 = vpop.f32.mrf.mxu0
    %v363 = vadd.f32 %v161, %v362
    %v364 = vpop.f32.mrf.mxu0
    %v365 = vadd.f32 %v163, %v364
    %v366 = vpop.f32.mrf.mxu0
    %v367 = vadd.f32 %v165, %v366
    %368 = vmatprep.mubr.bf16.mxu0 0
    %369 = vmatmul.mubr.bf16.gmra.mxu0 %v305
    %v370 = vpop.f32.mrf.mxu0
    %v371 = vadd.f32 %v169, %v370
    %v372 = vpop.f32.mrf.mxu0
    %v373 = vadd.f32 %v171, %v372
    %v374 = vpop.f32.mrf.mxu0
    %v375 = vadd.f32 %v173, %v374
    %v376 = vpop.f32.mrf.mxu0
    %v377 = vadd.f32 %v175, %v376
    %378 = vmatprep.mubr.bf16.mxu0 0
    %379 = vmatmul.mubr.bf16.gmra.mxu0 %v308
    %v380 = vpop.f32.mrf.mxu0
    %v381 = vadd.f32 %v179, %v380
    %v382 = vpop.f32.mrf.mxu0
    %v383 = vadd.f32 %v181, %v382
    %v384 = vpop.f32.mrf.mxu0
    %v385 = vadd.f32 %v183, %v384
    %v386 = vpop.f32.mrf.mxu0
    %v387 = vadd.f32 %v185, %v386
    %388 = vmatprep.mubr.bf16.mxu0 0
    %389 = vmatmul.mubr.bf16.gmra.mxu0 %v311
    %v390 = vpop.f32.mrf.mxu0
    %v391 = vadd.f32 %v189, %v390
    %v392 = vpop.f32.mrf.mxu0
    %v393 = vadd.f32 %v191, %v392
    %v394 = vpop.f32.mrf.mxu0
    %v395 = vadd.f32 %v193, %v394
    %v396 = vpop.f32.mrf.mxu0
    %v397 = vadd.f32 %v195, %v396
    %398 = vdwg.mxu0
    %399 = vmatprep.subr.bf16.mxu0 0
    %400 = vmatpush1.bf16.msra.mxu0 0
    %401 = vmatprep.subr.bf16.mxu0 0
    %402 = vmatpush1.bf16.msra.mxu0 0
    %403 = vmatprep.subr.bf16.mxu0 0
    %404 = vmatpush1.bf16.msra.mxu0 0
    %405 = vmatprep.subr.bf16.mxu0 0
    %406 = vmatpush1.bf16.msra.mxu0 0
    %407 = vmatprep.subr.bf16.mxu0 0
    %408 = vmatpush1.bf16.msra.mxu0 0
    %409 = vmatprep.subr.bf16.mxu0 0
    %410 = vmatpush1.bf16.msra.mxu0 0
    %411 = vmatprep.subr.bf16.mxu0 %v324
    %412 = vmatpush1.bf16.msra.mxu0 %v321
    %413 = vmatprep.subr.bf16.mxu0 %v291
    %414 = vmatpush1.bf16.msra.mxu0 %v290
    %415 = vmatprep.subr.bf16.mxu0 0
    %416 = vmatpush2.bf16.msra.mxu0 0
    %417 = vmatprep.subr.bf16.mxu0 0
    %418 = vmatpush2.bf16.msra.mxu0 0
    %419 = vmatprep.subr.bf16.mxu0 0
    %420 = vmatpush2.bf16.msra.mxu0 0
    %421 = vmatprep.subr.bf16.mxu0 0
    %422 = vmatpush2.bf16.msra.mxu0 0
    %423 = vmatprep.subr.bf16.mxu0 0
    %424 = vmatpush2.bf16.msra.mxu0 0
    %425 = vmatprep.subr.bf16.mxu0 0
    %426 = vmatpush2.bf16.msra.mxu0 0
    %427 = vmatprep.subr.bf16.mxu0 0
    %428 = vmatpush2.bf16.msra.mxu0 0
    %429 = vmatprep.subr.bf16.mxu0 0
    %430 = vmatpush2.bf16.msra.mxu0 0
    %431 = vmatprep.mubr.bf16.mxu0 0
    %432 = vmatmul.mubr.bf16.gmra.mxu0 %v302
    %v433 = vpop.f32.mrf.mxu0
    %v434 = vadd.f32 %v232, %v433
    %v435 = vpop.f32.mrf.mxu0
    %v436 = vadd.f32 %v234, %v435
    %v437 = vpop.f32.mrf.mxu0
    %v438 = vadd.f32 %v236, %v437
    %v439 = vpop.f32.mrf.mxu0
    %v440 = vadd.f32 %v238, %v439
    %441 = vmatprep.mubr.bf16.mxu0 0
    %442 = vmatmul.mubr.bf16.gmra.mxu0 %v305
    %v443 = vpop.f32.mrf.mxu0
    %v444 = vadd.f32 %v242, %v443
    %v445 = vpop.f32.mrf.mxu0
    %v446 = vadd.f32 %v244, %v445
    %v447 = vpop.f32.mrf.mxu0
    %v448 = vadd.f32 %v246, %v447
    %v449 = vpop.f32.mrf.mxu0
    %v450 = vadd.f32 %v248, %v449
    %451 = vmatprep.mubr.bf16.mxu0 0
    %452 = vmatmul.mubr.bf16.gmra.mxu0 %v308
    %v453 = vpop.f32.mrf.mxu0
    %v454 = vadd.f32 %v252, %v453
    %v455 = vpop.f32.mrf.mxu0
    %v456 = vadd.f32 %v254, %v455
    %v457 = vpop.f32.mrf.mxu0
    %v458 = vadd.f32 %v256, %v457
    %v459 = vpop.f32.mrf.mxu0
    %v460 = vadd.f32 %v258, %v459
    %461 = vmatprep.mubr.bf16.mxu0 0
    %462 = vmatmul.mubr.bf16.gmra.mxu0 %v311
    %v463 = vpop.f32.mrf.mxu0
    %v464 = vadd.f32 %v262, %v463
    %v465 = vpop.f32.mrf.mxu0
    %v466 = vadd.f32 %v264, %v465
    %v467 = vpop.f32.mrf.mxu0
    %v468 = vadd.f32 %v266, %v467
    %v469 = vpop.f32.mrf.mxu0
    %v470 = vadd.f32 %v268, %v469
    %471 = vdwg.mxu0
    %v472 = vld [vmem:[%s4] sm:$0xf]
    %v474 = vlaneseq
    %v475 = vshrl.u32 %v474, 7
    %v476 = vsub.s32 0, %v475
    %v477 = vrot.slane %v472, %v476
    %v478 = vlaneseq
    %v479 = vshrl.u32 %v478, 7
    %v480 = vsub.s32 1, %v479
    %v481 = vrot.slane %v472, %v480
    %v482 = vlaneseq
    %v483 = vshrl.u32 %v482, 7
    %v484 = vsub.s32 2, %v483
    %v485 = vrot.slane %v472, %v484
    %v486 = vlaneseq
    %v487 = vshrl.u32 %v486, 7
    %v488 = vsub.s32 3, %v487
    %v489 = vrot.slane %v472, %v488
    %v494 = vadd.f32 %v361, %v477
    %v495 = vadd.f32 %v363, %v481
    %v496 = vadd.f32 %v434, %v485
    %v497 = vadd.f32 %v436, %v489
    %v498 = vadd.f32 %v365, %v477
    %v499 = vadd.f32 %v367, %v481
    %v500 = vadd.f32 %v438, %v485
    %v501 = vadd.f32 %v440, %v489
    %v502 = vadd.f32 %v371, %v477
    %v503 = vadd.f32 %v373, %v481
    %v504 = vadd.f32 %v444, %v485
    %v505 = vadd.f32 %v446, %v489
    %v506 = vadd.f32 %v375, %v477
    %v507 = vadd.f32 %v377, %v481
    %v508 = vadd.f32 %v448, %v485
    %v509 = vadd.f32 %v450, %v489
    %v510 = vadd.f32 %v381, %v477
    %v511 = vadd.f32 %v383, %v481
    %v512 = vadd.f32 %v454, %v485
    %v513 = vadd.f32 %v456, %v489
    %v514 = vadd.f32 %v385, %v477
    %v515 = vadd.f32 %v387, %v481
    %v516 = vadd.f32 %v458, %v485
    %v517 = vadd.f32 %v460, %v489
    %v518 = vadd.f32 %v391, %v477
    %v519 = vadd.f32 %v393, %v481
    %v520 = vadd.f32 %v464, %v485
    %v521 = vadd.f32 %v466, %v489
    %v522 = vadd.f32 %v395, %v477
    %v523 = vadd.f32 %v397, %v481
    %v524 = vadd.f32 %v468, %v485
    %v525 = vadd.f32 %v470, %v489
    %v526 = vmax.f32 %v494, 0.0
    %v527 = vmax.f32 %v495, 0.0
    %v528 = vmax.f32 %v496, 0.0
    %v529 = vmax.f32 %v497, 0.0
    %v530 = vmax.f32 %v498, 0.0
    %v531 = vmax.f32 %v499, 0.0
    %v532 = vmax.f32 %v500, 0.0
    %v533 = vmax.f32 %v501, 0.0
    %v534 = vmax.f32 %v502, 0.0
    %v535 = vmax.f32 %v503, 0.0
    %v536 = vmax.f32 %v504, 0.0
    %v537 = vmax.f32 %v505, 0.0
    %v538 = vmax.f32 %v506, 0.0
    %v539 = vmax.f32 %v507, 0.0
    %v540 = vmax.f32 %v508, 0.0
    %v541 = vmax.f32 %v509, 0.0
    %v542 = vmax.f32 %v510, 0.0
    %v543 = vmax.f32 %v511, 0.0
    %v544 = vmax.f32 %v512, 0.0
    %v545 = vmax.f32 %v513, 0.0
    %v546 = vmax.f32 %v514, 0.0
    %v547 = vmax.f32 %v515, 0.0
    %v548 = vmax.f32 %v516, 0.0
    %v549 = vmax.f32 %v517, 0.0
    %v550 = vmax.f32 %v518, 0.0
    %v551 = vmax.f32 %v519, 0.0
    %v552 = vmax.f32 %v520, 0.0
    %v553 = vmax.f32 %v521, 0.0
    %v554 = vmax.f32 %v522, 0.0
    %v555 = vmax.f32 %v523, 0.0
    %v556 = vmax.f32 %v524, 0.0
    %v557 = vmax.f32 %v525, 0.0
    %v558 = vpack.c.bf16 %v530, %v526
    %v559 = vpack.c.bf16 %v531, %v527
    %v560 = vpack.c.bf16 %v532, %v528
    %v561 = vpack.c.bf16 %v533, %v529
    %v562 = vpack.c.bf16 %v538, %v534
    %v563 = vpack.c.bf16 %v539, %v535
    %v564 = vpack.c.bf16 %v540, %v536
    %v565 = vpack.c.bf16 %v541, %v537
    %v566 = vpack.c.bf16 %v546, %v542
    %v567 = vpack.c.bf16 %v547, %v543
    %v568 = vpack.c.bf16 %v548, %v544
    %v569 = vpack.c.bf16 %v549, %v545
    %v570 = vpack.c.bf16 %v554, %v550
    %v571 = vpack.c.bf16 %v555, %v551
    %v572 = vpack.c.bf16 %v556, %v552
    %v573 = vpack.c.bf16 %v557, %v553
    %v574 = vld [vmem:[#allocation3] sm:$0xff]
    %v575 = vld [vmem:[#allocation3 + $0x8] sm:$0xff]
    %v576 = vld [vmem:[#allocation3 + $0x10] sm:$0xff]
    %v577 = vld [vmem:[#allocation3 + $0x18] sm:$0xff]
    %v578 = vld [vmem:[#allocation3 + $0x20] sm:$0xff]
    %v579 = vld [vmem:[#allocation3 + $0x28] sm:$0xff]
    %v580 = vld [vmem:[#allocation3 + $0x30] sm:$0xff]
    %v581 = vld [vmem:[#allocation3 + $0x38] sm:$0xff]
    %v582 = vld [vmem:[#allocation3 + $0x40] sm:$0xff]
    %v583 = vld [vmem:[#allocation3 + $0x48] sm:$0xff]
    %v584 = vld [vmem:[#allocation3 + $0x50] sm:$0xff]
    %v585 = vld [vmem:[#allocation3 + $0x58] sm:$0xff]
    %v586 = vld [vmem:[#allocation3 + $0x60] sm:$0xff]
    %v587 = vld [vmem:[#allocation3 + $0x68] sm:$0xff]
    %v588 = vld [vmem:[#allocation3 + $0x70] sm:$0xff]
    %v589 = vld [vmem:[#allocation3 + $0x78] sm:$0xff]
    %v590 = vld [vmem:[#allocation3 + $0x80] sm:$0xff]
    %v591 = vld [vmem:[#allocation3 + $0x88] sm:$0xff]
    %v592 = vld [vmem:[#allocation3 + $0x90] sm:$0xff]
    %v593 = vld [vmem:[#allocation3 + $0x98] sm:$0xff]
    %v594 = vld [vmem:[#allocation3 + $0xa0] sm:$0xff]
    %v595 = vld [vmem:[#allocation3 + $0xa8] sm:$0xff]
    %v596 = vld [vmem:[#allocation3 + $0xb0] sm:$0xff]
    %v597 = vld [vmem:[#allocation3 + $0xb8] sm:$0xff]
    %v598 = vld [vmem:[#allocation3 + $0xc0] sm:$0xff]
    %v599 = vld [vmem:[#allocation3 + $0xc8] sm:$0xff]
    %v600 = vld [vmem:[#allocation3 + $0xd0] sm:$0xff]
    %v601 = vld [vmem:[#allocation3 + $0xd8] sm:$0xff]
    %v602 = vld [vmem:[#allocation3 + $0xe0] sm:$0xff]
    %v603 = vld [vmem:[#allocation3 + $0xe8] sm:$0xff]
    %v604 = vld [vmem:[#allocation3 + $0xf0] sm:$0xff]
    %v605 = vld [vmem:[#allocation3 + $0xf8] sm:$0xff]
    %v606 = vld [vmem:[#allocation3 + $0x100] sm:$0xff]
    %v607 = vld [vmem:[#allocation3 + $0x108] sm:$0xff]
    %v608 = vld [vmem:[#allocation3 + $0x110] sm:$0xff]
    %v609 = vld [vmem:[#allocation3 + $0x118] sm:$0xff]
    %v610 = vld [vmem:[#allocation3 + $0x120] sm:$0xff]
    %v611 = vld [vmem:[#allocation3 + $0x128] sm:$0xff]
    %v612 = vld [vmem:[#allocation3 + $0x130] sm:$0xff]
    %v613 = vld [vmem:[#allocation3 + $0x138] sm:$0xff]
    %v614 = vld [vmem:[#allocation3 + $0x140] sm:$0xff]
    %v615 = vld [vmem:[#allocation3 + $0x148] sm:$0xff]
    %v616 = vld [vmem:[#allocation3 + $0x150] sm:$0xff]
    %v617 = vld [vmem:[#allocation3 + $0x158] sm:$0xff]
    %v618 = vld [vmem:[#allocation3 + $0x160] sm:$0xff]
    %v619 = vld [vmem:[#allocation3 + $0x168] sm:$0xff]
    %v620 = vld [vmem:[#allocation3 + $0x170] sm:$0xff]
    %v621 = vld [vmem:[#allocation3 + $0x178] sm:$0xff]
    %v622 = vld [vmem:[#allocation3 + $0x180] sm:$0xff]
    %v623 = vld [vmem:[#allocation3 + $0x188] sm:$0xff]
    %v624 = vld [vmem:[#allocation3 + $0x190] sm:$0xff]
    %v625 = vld [vmem:[#allocation3 + $0x198] sm:$0xff]
    %v626 = vld [vmem:[#allocation3 + $0x1a0] sm:$0xff]
    %v627 = vld [vmem:[#allocation3 + $0x1a8] sm:$0xff]
    %v628 = vld [vmem:[#allocation3 + $0x1b0] sm:$0xff]
    %v629 = vld [vmem:[#allocation3 + $0x1b8] sm:$0xff]
    %v630 = vld [vmem:[#allocation3 + $0x1c0] sm:$0xff]
    %v631 = vld [vmem:[#allocation3 + $0x1c8] sm:$0xff]
    %v632 = vld [vmem:[#allocation3 + $0x1d0] sm:$0xff]
    %v633 = vld [vmem:[#allocation3 + $0x1d8] sm:$0xff]
    %v634 = vld [vmem:[#allocation3 + $0x1e0] sm:$0xff]
    %v635 = vld [vmem:[#allocation3 + $0x1e8] sm:$0xff]
    %v636 = vld [vmem:[#allocation3 + $0x1f0] sm:$0xff]
    %v637 = vld [vmem:[#allocation3 + $0x1f8] sm:$0xff]
    %v638 = vld [vmem:[%s6] sm:$0x3]
    %v640 = vlaneseq
    %v641 = vshrl.u32 %v640, 7
    %v642 = vsub.s32 0, %v641
    %v643 = vrot.slane %v638, %v642
    %v644 = vlaneseq
    %v645 = vshrl.u32 %v644, 7
    %v646 = vsub.s32 1, %v645
    %v647 = vrot.slane %v638, %v646
    %v714 = vunpack.c.l.b16 %v574
    %v715 = vunpack.c.h.b16 %v574
    %v716 = vunpack.c.l.b16 %v575
    %v717 = vunpack.c.h.b16 %v575
    %v718 = vunpack.c.l.b16 %v576
    %v719 = vunpack.c.h.b16 %v576
    %v720 = vunpack.c.l.b16 %v577
    %v721 = vunpack.c.h.b16 %v577
    %v722 = vunpack.c.l.b16 %v578
    %v723 = vunpack.c.h.b16 %v578
    %v724 = vunpack.c.l.b16 %v579
    %v725 = vunpack.c.h.b16 %v579
    %v726 = vunpack.c.l.b16 %v580
    %v727 = vunpack.c.h.b16 %v580
    %v728 = vunpack.c.l.b16 %v581
    %v729 = vunpack.c.h.b16 %v581
    %v730 = vunpack.c.l.b16 %v582
    %v731 = vunpack.c.h.b16 %v582
    %v732 = vunpack.c.l.b16 %v583
    %v733 = vunpack.c.h.b16 %v583
    %v734 = vunpack.c.l.b16 %v584
    %v735 = vunpack.c.h.b16 %v584
    %v736 = vunpack.c.l.b16 %v585
    %v737 = vunpack.c.h.b16 %v585
    %v738 = vunpack.c.l.b16 %v586
    %v739 = vunpack.c.h.b16 %v586
    %v740 = vunpack.c.l.b16 %v587
    %v741 = vunpack.c.h.b16 %v587
    %v742 = vunpack.c.l.b16 %v588
    %v743 = vunpack.c.h.b16 %v588
    %v744 = vunpack.c.l.b16 %v589
    %v745 = vunpack.c.h.b16 %v589
    %v746 = vunpack.c.l.b16 %v590
    %v747 = vunpack.c.h.b16 %v590
    %v748 = vunpack.c.l.b16 %v591
    %v749 = vunpack.c.h.b16 %v591
    %v750 = vunpack.c.l.b16 %v592
    %v751 = vunpack.c.h.b16 %v592
    %v752 = vunpack.c.l.b16 %v593
    %v753 = vunpack.c.h.b16 %v593
    %v754 = vunpack.c.l.b16 %v594
    %v755 = vunpack.c.h.b16 %v594
    %v756 = vunpack.c.l.b16 %v595
    %v757 = vunpack.c.h.b16 %v595
    %v758 = vunpack.c.l.b16 %v596
    %v759 = vunpack.c.h.b16 %v596
    %v760 = vunpack.c.l.b16 %v597
    %v761 = vunpack.c.h.b16 %v597
    %v762 = vunpack.c.l.b16 %v598
    %v763 = vunpack.c.h.b16 %v598
    %v764 = vunpack.c.l.b16 %v599
    %v765 = vunpack.c.h.b16 %v599
    %v766 = vunpack.c.l.b16 %v600
    %v767 = vunpack.c.h.b16 %v600
    %v768 = vunpack.c.l.b16 %v601
    %v769 = vunpack.c.h.b16 %v601
    %v770 = vunpack.c.l.b16 %v602
    %v771 = vunpack.c.h.b16 %v602
    %v772 = vunpack.c.l.b16 %v603
    %v773 = vunpack.c.h.b16 %v603
    %v774 = vunpack.c.l.b16 %v604
    %v775 = vunpack.c.h.b16 %v604
    %v776 = vunpack.c.l.b16 %v605
    %v777 = vunpack.c.h.b16 %v605
    %v778 = vunpack.c.l.b16 %v606
    %v779 = vunpack.c.h.b16 %v606
    %v780 = vunpack.c.l.b16 %v607
    %v781 = vunpack.c.h.b16 %v607
    %v782 = vunpack.c.l.b16 %v608
    %v783 = vunpack.c.h.b16 %v608
    %v784 = vunpack.c.l.b16 %v609
    %v785 = vunpack.c.h.b16 %v609
    %v786 = vunpack.c.l.b16 %v610
    %v787 = vunpack.c.h.b16 %v610
    %v788 = vunpack.c.l.b16 %v611
    %v789 = vunpack.c.h.b16 %v611
    %v790 = vunpack.c.l.b16 %v612
    %v791 = vunpack.c.h.b16 %v612
    %v792 = vunpack.c.l.b16 %v613
    %v793 = vunpack.c.h.b16 %v613
    %v794 = vunpack.c.l.b16 %v614
    %v795 = vunpack.c.h.b16 %v614
    %v796 = vunpack.c.l.b16 %v615
    %v797 = vunpack.c.h.b16 %v615
    %v798 = vunpack.c.l.b16 %v616
    %v799 = vunpack.c.h.b16 %v616
    %v800 = vunpack.c.l.b16 %v617
    %v801 = vunpack.c.h.b16 %v617
    %v802 = vunpack.c.l.b16 %v618
    %v803 = vunpack.c.h.b16 %v618
    %v804 = vunpack.c.l.b16 %v619
    %v805 = vunpack.c.h.b16 %v619
    %v806 = vunpack.c.l.b16 %v620
    %v807 = vunpack.c.h.b16 %v620
    %v808 = vunpack.c.l.b16 %v621
    %v809 = vunpack.c.h.b16 %v621
    %v810 = vunpack.c.l.b16 %v622
    %v811 = vunpack.c.h.b16 %v622
    %v812 = vunpack.c.l.b16 %v623
    %v813 = vunpack.c.h.b16 %v623
    %v814 = vunpack.c.l.b16 %v624
    %v815 = vunpack.c.h.b16 %v624
    %v816 = vunpack.c.l.b16 %v625
    %v817 = vunpack.c.h.b16 %v625
    %v818 = vunpack.c.l.b16 %v626
    %v819 = vunpack.c.h.b16 %v626
    %v820 = vunpack.c.l.b16 %v627
    %v821 = vunpack.c.h.b16 %v627
    %v822 = vunpack.c.l.b16 %v628
    %v823 = vunpack.c.h.b16 %v628
    %v824 = vunpack.c.l.b16 %v629
    %v825 = vunpack.c.h.b16 %v629
    %v826 = vunpack.c.l.b16 %v630
    %v827 = vunpack.c.h.b16 %v630
    %v828 = vunpack.c.l.b16 %v631
    %v829 = vunpack.c.h.b16 %v631
    %v830 = vunpack.c.l.b16 %v632
    %v831 = vunpack.c.h.b16 %v632
    %v832 = vunpack.c.l.b16 %v633
    %v833 = vunpack.c.h.b16 %v633
    %v834 = vunpack.c.l.b16 %v634
    %v835 = vunpack.c.h.b16 %v634
    %v836 = vunpack.c.l.b16 %v635
    %v837 = vunpack.c.h.b16 %v635
    %v838 = vunpack.c.l.b16 %v636
    %v839 = vunpack.c.h.b16 %v636
    %v840 = vunpack.c.l.b16 %v637
    %v841 = vunpack.c.h.b16 %v637
    %v842 = vpack.c.b16 %v716, %v714
    %v843 = vpack.c.b16 %v717, %v715
    %v844 = vpack.c.b16 %v720, %v718
    %v845 = vpack.c.b16 %v721, %v719
    %v846 = vpack.c.b16 %v724, %v722
    %v847 = vpack.c.b16 %v725, %v723
    %v848 = vpack.c.b16 %v728, %v726
    %v849 = vpack.c.b16 %v729, %v727
    %v850 = vpack.c.b16 %v732, %v730
    %v851 = vpack.c.b16 %v733, %v731
    %v852 = vpack.c.b16 %v736, %v734
    %v853 = vpack.c.b16 %v737, %v735
    %v854 = vpack.c.b16 %v740, %v738
    %v855 = vpack.c.b16 %v741, %v739
    %v856 = vpack.c.b16 %v744, %v742
    %v857 = vpack.c.b16 %v745, %v743
    %v858 = vpack.c.b16 %v748, %v746
    %v859 = vpack.c.b16 %v749, %v747
    %v860 = vpack.c.b16 %v752, %v750
    %v861 = vpack.c.b16 %v753, %v751
    %v862 = vpack.c.b16 %v756, %v754
    %v863 = vpack.c.b16 %v757, %v755
    %v864 = vpack.c.b16 %v760, %v758
    %v865 = vpack.c.b16 %v761, %v759
    %v866 = vpack.c.b16 %v764, %v762
    %v867 = vpack.c.b16 %v765, %v763
    %v868 = vpack.c.b16 %v768, %v766
    %v869 = vpack.c.b16 %v769, %v767
    %v870 = vpack.c.b16 %v772, %v770
    %v871 = vpack.c.b16 %v773, %v771
    %v872 = vpack.c.b16 %v776, %v774
    %v873 = vpack.c.b16 %v777, %v775
    %v874 = vpack.c.b16 %v780, %v778
    %v875 = vpack.c.b16 %v781, %v779
    %v876 = vpack.c.b16 %v784, %v782
    %v877 = vpack.c.b16 %v785, %v783
    %v878 = vpack.c.b16 %v788, %v786
    %v879 = vpack.c.b16 %v789, %v787
    %v880 = vpack.c.b16 %v792, %v790
    %v881 = vpack.c.b16 %v793, %v791
    %v882 = vpack.c.b16 %v796, %v794
    %v883 = vpack.c.b16 %v797, %v795
    %v884 = vpack.c.b16 %v800, %v798
    %v885 = vpack.c.b16 %v801, %v799
    %v886 = vpack.c.b16 %v804, %v802
    %v887 = vpack.c.b16 %v805, %v803
    %v888 = vpack.c.b16 %v808, %v806
    %v889 = vpack.c.b16 %v809, %v807
    %v890 = vpack.c.b16 %v812, %v810
    %v891 = vpack.c.b16 %v813, %v811
    %v892 = vpack.c.b16 %v816, %v814
    %v893 = vpack.c.b16 %v817, %v815
    %v894 = vpack.c.b16 %v820, %v818
    %v895 = vpack.c.b16 %v821, %v819
    %v896 = vpack.c.b16 %v824, %v822
    %v897 = vpack.c.b16 %v825, %v823
    %v898 = vpack.c.b16 %v828, %v826
    %v899 = vpack.c.b16 %v829, %v827
    %v900 = vpack.c.b16 %v832, %v830
    %v901 = vpack.c.b16 %v833, %v831
    %v902 = vpack.c.b16 %v836, %v834
    %v903 = vpack.c.b16 %v837, %v835
    %v904 = vpack.c.b16 %v840, %v838
    %v905 = vpack.c.b16 %v841, %v839
    %970 = vmatprep.subr.bf16.mxu0 %v857
    %971 = vmatpush1.bf16.msra.mxu0 %v856
    %972 = vmatprep.subr.bf16.mxu0 %v855
    %973 = vmatpush1.bf16.msra.mxu0 %v854
    %974 = vmatprep.subr.bf16.mxu0 %v853
    %975 = vmatpush1.bf16.msra.mxu0 %v852
    %976 = vmatprep.subr.bf16.mxu0 %v851
    %977 = vmatpush1.bf16.msra.mxu0 %v850
    %978 = vmatprep.subr.bf16.mxu0 %v849
    %979 = vmatpush1.bf16.msra.mxu0 %v848
    %980 = vmatprep.subr.bf16.mxu0 %v847
    %981 = vmatpush1.bf16.msra.mxu0 %v846
    %982 = vmatprep.subr.bf16.mxu0 %v845
    %983 = vmatpush1.bf16.msra.mxu0 %v844
    %984 = vmatprep.subr.bf16.mxu0 %v843
    %985 = vmatpush1.bf16.msra.mxu0 %v842
    %986 = vmatprep.subr.bf16.mxu0 %v873
    %987 = vmatpush2.bf16.msra.mxu0 %v872
    %988 = vmatprep.subr.bf16.mxu0 %v871
    %989 = vmatpush2.bf16.msra.mxu0 %v870
    %990 = vmatprep.subr.bf16.mxu0 %v869
    %991 = vmatpush2.bf16.msra.mxu0 %v868
    %992 = vmatprep.subr.bf16.mxu0 %v867
    %993 = vmatpush2.bf16.msra.mxu0 %v866
    %994 = vmatprep.subr.bf16.mxu0 %v865
    %995 = vmatpush2.bf16.msra.mxu0 %v864
    %996 = vmatprep.subr.bf16.mxu0 %v863
    %997 = vmatpush2.bf16.msra.mxu0 %v862
    %998 = vmatprep.subr.bf16.mxu0 %v861
    %999 = vmatpush2.bf16.msra.mxu0 %v860
    %1000 = vmatprep.subr.bf16.mxu0 %v859
    %1001 = vmatpush2.bf16.msra.mxu0 %v858
    %1002 = vmatprep.mubr.bf16.mxu0 %v559
    %1003 = vmatmul.mubr.bf16.gmra.mxu0 %v558
    %v1004 = vpop.f32.mrf.mxu0
    %v1005 = vadd.f32 %v643, %v1004
    %v1006 = vpop.f32.mrf.mxu0
    %v1007 = vadd.f32 %v647, %v1006
    %v1008 = vpop.f32.mrf.mxu0
    %v1009 = vadd.f32 %v643, %v1008
    %v1010 = vpop.f32.mrf.mxu0
    %v1011 = vadd.f32 %v647, %v1010
    %1012 = vmatprep.mubr.bf16.mxu0 %v563
    %1013 = vmatmul.mubr.bf16.gmra.mxu0 %v562
    %v1014 = vpop.f32.mrf.mxu0
    %v1015 = vadd.f32 %v643, %v1014
    %v1016 = vpop.f32.mrf.mxu0
    %v1017 = vadd.f32 %v647, %v1016
    %v1018 = vpop.f32.mrf.mxu0
    %v1019 = vadd.f32 %v643, %v1018
    %v1020 = vpop.f32.mrf.mxu0
    %v1021 = vadd.f32 %v647, %v1020
    %1022 = vmatprep.mubr.bf16.mxu0 %v567
    %1023 = vmatmul.mubr.bf16.gmra.mxu0 %v566
    %v1024 = vpop.f32.mrf.mxu0
    %v1025 = vadd.f32 %v643, %v1024
    %v1026 = vpop.f32.mrf.mxu0
    %v1027 = vadd.f32 %v647, %v1026
    %v1028 = vpop.f32.mrf.mxu0
    %v1029 = vadd.f32 %v643, %v1028
    %v1030 = vpop.f32.mrf.mxu0
    %v1031 = vadd.f32 %v647, %v1030
    %1032 = vmatprep.mubr.bf16.mxu0 %v571
    %1033 = vmatmul.mubr.bf16.gmra.mxu0 %v570
    %v1034 = vpop.f32.mrf.mxu0
    %v1035 = vadd.f32 %v643, %v1034
    %v1036 = vpop.f32.mrf.mxu0
    %v1037 = vadd.f32 %v647, %v1036
    %v1038 = vpop.f32.mrf.mxu0
    %v1039 = vadd.f32 %v643, %v1038
    %v1040 = vpop.f32.mrf.mxu0
    %v1041 = vadd.f32 %v647, %v1040
    %1042 = vdwg.mxu0
    %1043 = vmatprep.subr.bf16.mxu0 %v889
    %1044 = vmatpush1.bf16.msra.mxu0 %v888
    %1045 = vmatprep.subr.bf16.mxu0 %v887
    %1046 = vmatpush1.bf16.msra.mxu0 %v886
    %1047 = vmatprep.subr.bf16.mxu0 %v885
    %1048 = vmatpush1.bf16.msra.mxu0 %v884
    %1049 = vmatprep.subr.bf16.mxu0 %v883
    %1050 = vmatpush1.bf16.msra.mxu0 %v882
    %1051 = vmatprep.subr.bf16.mxu0 %v881
    %1052 = vmatpush1.bf16.msra.mxu0 %v880
    %1053 = vmatprep.subr.bf16.mxu0 %v879
    %1054 = vmatpush1.bf16.msra.mxu0 %v878
    %1055 = vmatprep.subr.bf16.mxu0 %v877
    %1056 = vmatpush1.bf16.msra.mxu0 %v876
    %1057 = vmatprep.subr.bf16.mxu0 %v875
    %1058 = vmatpush1.bf16.msra.mxu0 %v874
    %1059 = vmatprep.subr.bf16.mxu0 %v905
    %1060 = vmatpush2.bf16.msra.mxu0 %v904
    %1061 = vmatprep.subr.bf16.mxu0 %v903
    %1062 = vmatpush2.bf16.msra.mxu0 %v902
    %1063 = vmatprep.subr.bf16.mxu0 %v901
    %1064 = vmatpush2.bf16.msra.mxu0 %v900
    %1065 = vmatprep.subr.bf16.mxu0 %v899
    %1066 = vmatpush2.bf16.msra.mxu0 %v898
    %1067 = vmatprep.subr.bf16.mxu0 %v897
    %1068 = vmatpush2.bf16.msra.mxu0 %v896
    %1069 = vmatprep.subr.bf16.mxu0 %v895
    %1070 = vmatpush2.bf16.msra.mxu0 %v894
    %1071 = vmatprep.subr.bf16.mxu0 %v893
    %1072 = vmatpush2.bf16.msra.mxu0 %v892
    %1073 = vmatprep.subr.bf16.mxu0 %v891
    %1074 = vmatpush2.bf16.msra.mxu0 %v890
    %1075 = vmatprep.mubr.bf16.mxu0 %v561
    %1076 = vmatmul.mubr.bf16.gmra.mxu0 %v560
    %v1077 = vpop.f32.mrf.mxu0
    %v1078 = vadd.f32 %v1005, %v1077
    %v1079 = vpop.f32.mrf.mxu0
    %v1080 = vadd.f32 %v1007, %v1079
    %v1081 = vpop.f32.mrf.mxu0
    %v1082 = vadd.f32 %v1009, %v1081
    %v1083 = vpop.f32.mrf.mxu0
    %v1084 = vadd.f32 %v1011, %v1083
    %1085 = vmatprep.mubr.bf16.mxu0 %v565
    %1086 = vmatmul.mubr.bf16.gmra.mxu0 %v564
    %v1087 = vpop.f32.mrf.mxu0
    %v1088 = vadd.f32 %v1015, %v1087
    %v1089 = vpop.f32.mrf.mxu0
    %v1090 = vadd.f32 %v1017, %v1089
    %v1091 = vpop.f32.mrf.mxu0
    %v1092 = vadd.f32 %v1019, %v1091
    %v1093 = vpop.f32.mrf.mxu0
    %v1094 = vadd.f32 %v1021, %v1093
    %1095 = vmatprep.mubr.bf16.mxu0 %v569
    %1096 = vmatmul.mubr.bf16.gmra.mxu0 %v568
    %v1097 = vpop.f32.mrf.mxu0
    %v1098 = vadd.f32 %v1025, %v1097
    %v1099 = vpop.f32.mrf.mxu0
    %v1100 = vadd.f32 %v1027, %v1099
    %v1101 = vpop.f32.mrf.mxu0
    %v1102 = vadd.f32 %v1029, %v1101
    %v1103 = vpop.f32.mrf.mxu0
    %v1104 = vadd.f32 %v1031, %v1103
    %1105 = vmatprep.mubr.bf16.mxu0 %v573
    %1106 = vmatmul.mubr.bf16.gmra.mxu0 %v572
    %v1107 = vpop.f32.mrf.mxu0
    %v1108 = vadd.f32 %v1035, %v1107
    %v1109 = vpop.f32.mrf.mxu0
    %v1110 = vadd.f32 %v1037, %v1109
    %v1111 = vpop.f32.mrf.mxu0
    %v1112 = vadd.f32 %v1039, %v1111
    %v1113 = vpop.f32.mrf.mxu0
    %v1114 = vadd.f32 %v1041, %v1113
    %1115 = vdwg.mxu0
    %v1116 = vmax.f32 %v1078, 0.0
    %v1117 = vmax.f32 %v1080, 0.0
    %v1118 = vmax.f32 %v1082, 0.0
    %v1119 = vmax.f32 %v1084, 0.0
    %v1120 = vmax.f32 %v1088, 0.0
    %v1121 = vmax.f32 %v1090, 0.0
    %v1122 = vmax.f32 %v1092, 0.0
    %v1123 = vmax.f32 %v1094, 0.0
    %v1124 = vmax.f32 %v1098, 0.0
    %v1125 = vmax.f32 %v1100, 0.0
    %v1126 = vmax.f32 %v1102, 0.0
    %v1127 = vmax.f32 %v1104, 0.0
    %v1128 = vmax.f32 %v1108, 0.0
    %v1129 = vmax.f32 %v1110, 0.0
    %v1130 = vmax.f32 %v1112, 0.0
    %v1131 = vmax.f32 %v1114, 0.0
    %v1132 = vld [vmem:[%s7] sm:$0x3]
    %v1133 = vpack.c.bf16 %v1118, %v1116
    %v1134 = vpack.c.bf16 %v1119, %v1117
    %v1135 = vpack.c.bf16 %v1122, %v1120
    %v1136 = vpack.c.bf16 %v1123, %v1121
    %v1137 = vpack.c.bf16 %v1126, %v1124
    %v1138 = vpack.c.bf16 %v1127, %v1125
    %v1139 = vpack.c.bf16 %v1130, %v1128
    %v1140 = vpack.c.bf16 %v1131, %v1129
    %s1141 = sld [smem:[#allocation2]]
    %v1142 = vstv %s1141
    %v1145 = vunpack.c.l.s4 1966171168
    %v1146 = vunpack.c.0.s8 %v1145
    %v1147 = vlaneseq
    %v1148 = vshrl.u32 %v1147, 7
    %v1149 = vsub.s32 %v1146, %v1148
    %v1150 = vrot.slane %v1132, %v1149
    %v1151 = vcombine.high %v1150, %v1150
    %v1153 = vunpack.c.l.s4 1966171168
    %v1154 = vunpack.c.0.s8 %v1153
    %v1155 = vlaneseq
    %v1156 = vshrl.u32 %v1155, 7
    %v1157 = vsub.s32 %v1154, %v1156
    %v1158 = vrot.slane %v1150, %v1157
    %v1160 = vunpack.c.l.s4 1966171168
    %v1161 = vunpack.c.0.s8 %v1160
    %v1162 = vlaneseq
    %v1163 = vshrl.u32 %v1162, 7
    %v1164 = vsub.s32 %v1161, %v1163
    %v1165 = vrot.slane %v1151, %v1164
    %1168 = vmatprep.subr.bf16.mxu0 0
    %1169 = vmatpush1.bf16.xpose.msra.mxu0 0
    %1170 = vmatprep.subr.bf16.mxu0 0
    %1171 = vmatpush1.bf16.xpose.msra.mxu0 0
    %1172 = vmatprep.subr.bf16.mxu0 0
    %1173 = vmatpush1.bf16.xpose.msra.mxu0 0
    %1174 = vmatprep.subr.bf16.mxu0 0
    %1175 = vmatpush1.bf16.xpose.msra.mxu0 0
    %1176 = vmatprep.subr.bf16.mxu0 %v1140
    %1177 = vmatpush1.bf16.xpose.msra.mxu0 %v1139
    %1178 = vmatprep.subr.bf16.mxu0 %v1138
    %1179 = vmatpush1.bf16.xpose.msra.mxu0 %v1137
    %1180 = vmatprep.subr.bf16.mxu0 %v1136
    %1181 = vmatpush1.bf16.xpose.msra.mxu0 %v1135
    %1182 = vmatprep.subr.bf16.mxu0 %v1134
    %1183 = vmatpush1.bf16.xpose.msra.mxu0 %v1133
    %1184 = vmatprep.subr.bf16.mxu0 0
    %1185 = vmatpush2.bf16.xpose.msra.mxu0 0
    %1186 = vmatprep.subr.bf16.mxu0 0
    %1187 = vmatpush2.bf16.xpose.msra.mxu0 0
    %1188 = vmatprep.subr.bf16.mxu0 0
    %1189 = vmatpush2.bf16.xpose.msra.mxu0 0
    %1190 = vmatprep.subr.bf16.mxu0 0
    %1191 = vmatpush2.bf16.xpose.msra.mxu0 0
    %1192 = vmatprep.subr.bf16.mxu0 0
    %1193 = vmatpush2.bf16.xpose.msra.mxu0 0
    %1194 = vmatprep.subr.bf16.mxu0 0
    %1195 = vmatpush2.bf16.xpose.msra.mxu0 0
    %1196 = vmatprep.subr.bf16.mxu0 0
    %1197 = vmatpush2.bf16.xpose.msra.mxu0 0
    %1198 = vmatprep.subr.bf16.mxu0 0
    %1199 = vmatpush2.bf16.xpose.msra.mxu0 0
    %1200 = vmatprep.mubr.bf16.mxu0 %v1165
    %1201 = vmatmul.mubr.bf16.gmra.mxu0 %v1158
    %v1202 = vpop.f32.mrf.mxu0
    %v1203 = vadd.f32 %v1142, %v1202
    %v1204 = vpop.f32.mrf.mxu0
    %v1205 = vpop.f32.mrf.mxu0
    %v1206 = vpop.f32.mrf.mxu0
    %1207 = vdwg.mxu0
    %vm1208 = vcmask 516096
    %1209 = vst.msk [vmem:[#allocation6] sm:$0x1] %vm1208, %v1203
    // Predicated region
    $region42: #{tpu_custom_call.1} parent=1 // pred_check
      _
    $region43: #{tpu_custom_call.1} parent=1 // pred_check_branch
      %1211 = sbr.rel (0) target = $region45
    $region44: #{tpu_custom_call.1} parent=1 // pred_region
      %s1213 = ssub.s32 16, 16
      %1214 = vsyncadd [#allocation5], %s1213
      %s1216 = sshll.u32 [#allocation6], 4
      %s1217 = int_to_ptr.vmem [resolvable:$true] %s1216
      %1219 = dma.vmem_to_hbm [thread:$0]  %s1217, 16, %s9, [#allocation5]
    $region45: #{tpu_custom_call.1} parent=1 // pred_fallthru
      _
    // Predicated region
    $region46: #{tpu_custom_call.1} parent=1 // pred_check
      _
    $region47: #{tpu_custom_call.1} parent=1 // pred_check_branch
      %1221 = sbr.rel (0) target = $region49
    $region48: #{tpu_custom_call.1} parent=1 // pred_region
      %1222 = dma.done [#allocation5], 16
    $region49: #{tpu_custom_call.1} parent=1 // pred_fallthru
      _
    %1223 = vsyncpa [#allocation4], 1
    %1224 = vsyncpa [#allocation5], 1

</llo_original>
